<compile_context>
chip_gen: v6e
topology: v6e:2x2x1
jax: 0.10.0
libtpu: 0.0.40
codegen_flags: <defaults>
</compile_context>

<pallas_src>
import dataclasses
import functools

import jax
import jax.numpy as jnp
from jax.experimental import pallas as pl
from jax.experimental.pallas import tpu as pltpu

_LANE = 128
_HAS_BUFFERED = hasattr(pl, "Buffered")


def _round_up(x: int, m: int) -> int:
    return (x + m - 1) // m * m


def _cdiv(a: int, b: int) -> int:
    return (a + b - 1) // b


def _pad2d(a, rows, cols):
    r, c = a.shape
    if r == rows and c == cols:
        return a
    return jnp.pad(a, ((0, rows - r), (0, cols - c)))


def _vmem_capacity_bytes() -> int:
    """Per-TensorCore VMEM capacity (64 MiB on v7x, 128 MiB on v5e/v6e)."""
    try:
        cap = int(pltpu.get_tpu_info().vmem_capacity_bytes)
        if cap > 0:
            return cap
    except Exception:
        pass
    return 128 * 1024 * 1024


def _vmem_limit_bytes(footprint: int, cap: int) -> int:
    limit = max(int(footprint * 5 // 4) + (4 << 20), 16 << 20)
    return int(min(limit, cap * 3 // 4))


def _invariant_spec(shape):
    """BlockSpec for a grid-invariant block; single VMEM buffer if supported."""
    if _HAS_BUFFERED:
        try:
            return pl.BlockSpec(shape, lambda i: (0, 0),
                                pipeline_mode=pl.Buffered(1))
        except TypeError:
            pass
    return pl.BlockSpec(shape, lambda i: (0, 0))


# ---------------------------------------------------------------------------
# Path 1: fully fused MLP — one pallas_call for all layers.
# ---------------------------------------------------------------------------
def _fused_mlp_kernel(x_ref, *refs, num_layers, dims_p):
    """refs = (w0, b0, ..., w_{L-1}, b_{L-1}, o_ref[, h_scratch]).

    Weights are (Kp, Np) in compute dtype, biases (1, Np) f32.  MXU
    accumulation is f32; bias-add + ReLU fused into the epilogue.  The
    inter-layer activation is staged through a VMEM scratch so vreg pressure
    stays bounded for wide hidden dims.
    """
    o_ref = refs[2 * num_layers]
    h_ref = refs[2 * num_layers + 1] if len(refs) > 2 * num_layers + 1 else None

    h = x_ref[...]
    for layer in range(num_layers):           # static unroll (layer count fixed)
        w_ref = refs[2 * layer]
        b_ref = refs[2 * layer + 1]
        acc = jnp.dot(h, w_ref[...], preferred_element_type=jnp.float32)
        acc = acc + b_ref[...].astype(jnp.float32)    # (1, Np) broadcast
        if layer < num_layers - 1:
            acc = jnp.maximum(acc, 0.0)               # ReLU on hidden layers
            n_next = dims_p[layer + 1]
            h_ref[:, :n_next] = acc.astype(h_ref.dtype)
            h = h_ref[:, :n_next]
        else:
            o_ref[...] = acc.astype(o_ref.dtype)


def _fused_footprint_bytes(tm, dims_p, num_layers, compute_dtype, out_dtype):
    c = jnp.dtype(compute_dtype).itemsize
    o = jnp.dtype(out_dtype).itemsize
    w_bufs = 1 if _HAS_BUFFERED else 2
    params = w_bufs * sum(dims_p[i] * dims_p[i + 1] * c + dims_p[i + 1] * 4
                          for i in range(num_layers))
    x_tiles = 2 * tm * dims_p[0] * c           # double-buffered input tile
    out_tiles = 2 * tm * dims_p[-1] * o        # double-buffered output tile
    inter = max(dims_p[1:num_layers]) if num_layers > 1 else 0
    scratch = tm * inter * c                   # activation scratch (1 buffer)
    live = 2 * tm * max(dims_p) * 4            # live f32 accumulator / casts
    return params + x_tiles + out_tiles + scratch + live


def _mlp_forward_fused(prep, x):
    M = x.shape[0]
    dims_p = prep.dims_p
    num_layers = len(prep.padded_params)
    sub = 16 if prep.compute_dtype == jnp.bfloat16 else 8

    # Batch tile: minimize padding, cap at 256, prefer >=2 grid steps so both
    # v7x TensorCores get work along the "parallel" axis.
    n_m = max(1, _cdiv(M, 256))
    if n_m == 1 and M > sub:
        n_m = 2
    tm = min(256, max(sub, _round_up(_cdiv(M, n_m), sub)))
    tm = min(tm, _round_up(M, sub))
    Mp = _round_up(M, tm)

    xp = _pad2d(x, Mp, dims_p[0]).astype(prep.compute_dtype)
    inputs = [xp]
    in_specs = [pl.BlockSpec((tm, dims_p[0]), lambda i: (i, 0))]
    for li, (wp, bp) in enumerate(prep.padded_params):
        kp, np_ = dims_p[li], dims_p[li + 1]
        inputs.append(wp)
        inputs.append(bp)
        in_specs.append(_invariant_spec((kp, np_)))   # weights: single buffer
        in_specs.append(_invariant_spec((1, np_)))    # bias: single buffer

    inter_p = max(dims_p[1:num_layers]) if num_layers > 1 else 0
    scratch_shapes = []
    if inter_p:
        scratch_shapes.append(pltpu.VMEM((tm, inter_p), prep.compute_dtype))

    footprint = _fused_footprint_bytes(tm, dims_p, num_layers,
                                       prep.compute_dtype, prep.out_dtype)
    vmem_limit = _vmem_limit_bytes(footprint, prep.vmem_cap)

    flops = sum(2 * Mp * dims_p[i] * dims_p[i + 1] for i in range(num_layers))
    bytes_accessed = int(sum(int(a.size) * a.dtype.itemsize for a in inputs)
                         + Mp * dims_p[-1] * jnp.dtype(prep.out_dtype).itemsize)

    kernel = functools.partial(_fused_mlp_kernel, num_layers=num_layers,
                               dims_p=dims_p)
    out = pl.pallas_call(
        kernel,
        out_shape=jax.ShapeDtypeStruct((Mp, dims_p[-1]), prep.out_dtype),
        grid=(Mp // tm,),
        in_specs=in_specs,
        out_specs=pl.BlockSpec((tm, dims_p[-1]), lambda i: (i, 0)),
        scratch_shapes=scratch_shapes,
        compiler_params=pltpu.CompilerParams(
            dimension_semantics=("parallel",),
            vmem_limit_bytes=vmem_limit),
        cost_estimate=pl.CostEstimate(
            flops=flops, transcendentals=0, bytes_accessed=bytes_accessed),
    )(*inputs)
    return out[:M, :prep.dims[-1]]


# ---------------------------------------------------------------------------
# Path 2: shape-general tiled Linear (+ReLU) for layers too big to fuse.
# ---------------------------------------------------------------------------
def _tiled_linear_kernel(x_ref, w_ref, b_ref, o_ref, acc_ref, *, apply_relu):
    k = pl.program_id(2)

    @pl.when(k == 0)
    def _():
        acc_ref[...] = jnp.zeros_like(acc_ref)

    acc_ref[...] += jnp.dot(x_ref[...], w_ref[...],
                            preferred_element_type=jnp.float32)

    @pl.when(k == pl.num_programs(2) - 1)
    def _():
        out = acc_ref[...] + b_ref[...].astype(jnp.float32)
        if apply_relu:
            out = jnp.maximum(out, 0.0)
        o_ref[...] = out.astype(o_ref.dtype)


def _tiled_footprint(tm, tn, tk, c_item, o_item):
    return (2 * (tm * tk + tk * tn + tn) * c_item   # double-buffered x / w / b
            + 2 * tm * tn * o_item                  # double-buffered output
            + tm * tn * 4)                          # f32 accumulator scratch


def _pick_feat_pad(d: int) -> int:
    # 256-multiples (>128) keep tn/tk on the 2x256^2 MXU width (v6e/v7x).
    return 128 if d <= 128 else _round_up(d, 256)


def _pick_div_tile(dp: int, pref: int) -> int:
    """Largest tile <= pref that divides dp (dp is 128- or 256-aligned)."""
    if dp <= pref:
        return dp
    t = max(256, (pref // 256) * 256)
    while t > 256:
        if dp % t == 0:
            return t
        t -= 256
    return 256


def _linear_tiled_call(xp, wp, bp, *, apply_relu, out_dtype, tm, tn, tk,
                       vmem_limit):
    Mp, Kp = xp.shape
    _, Np = wp.shape
    kernel = functools.partial(_tiled_linear_kernel, apply_relu=apply_relu)
    return pl.pallas_call(
        kernel,
        out_shape=jax.ShapeDtypeStruct((Mp, Np), out_dtype),
        grid=(Mp // tm, Np // tn, Kp // tk),
        in_specs=[
            pl.BlockSpec((tm, tk), lambda i, j, k: (i, k)),
            pl.BlockSpec((tk, tn), lambda i, j, k: (k, j)),
            pl.BlockSpec((1, tn), lambda i, j, k: (0, j)),
        ],
        out_specs=pl.BlockSpec((tm, tn), lambda i, j, k: (i, j)),
        scratch_shapes=[pltpu.VMEM((tm, tn), jnp.float32)],
        compiler_params=pltpu.CompilerParams(
            dimension_semantics=("parallel", "parallel", "arbitrary"),
            vmem_limit_bytes=vmem_limit),
        cost_estimate=pl.CostEstimate(
            flops=2 * Mp * Kp * Np,
            transcendentals=0,
            bytes_accessed=int(int(xp.size) * xp.dtype.itemsize
                               + int(wp.size) * wp.dtype.itemsize
                               + int(bp.size) * bp.dtype.itemsize
                               + Mp * Np * jnp.dtype(out_dtype).itemsize)),
    )(xp, wp, bp)


def _mlp_forward_tiled(prep, x):
    M = x.shape[0]
    P = prep.dims_p                              # per-feature padded dims
    num_layers = len(prep.padded_params)
    c_dtype = prep.compute_dtype
    c_item = jnp.dtype(c_dtype).itemsize
    sub = 16 if c_dtype == jnp.bfloat16 else 8
    budget = min(prep.vmem_cap * 3 // 8, 24 << 20)   # leave pipeline headroom
    tk_pref = 2048 if c_dtype == jnp.bfloat16 else 1024
    tn_pref = 512

    # Batch tile: minimize padding; ensure >= 2 parallel grid steps if possible.
    max_n_tiles = max(_cdiv(P[i + 1], min(tn_pref, P[i + 1]))
                      for i in range(num_layers))
    n_m = max(1, _cdiv(M, 512))
    if n_m * max_n_tiles < 2 and M > sub:
        n_m = 2
    tm = max(sub, _round_up(_cdiv(M, n_m), sub))
    tm = min(tm, _round_up(M, sub), 512)
    Mp = _round_up(M, tm)

    # Padded activation stays padded layer-to-layer (no re-pad per layer).
    h = _pad2d(x, Mp, P[0]).astype(c_dtype)
    for li, (wp, bp) in enumerate(prep.padded_params):
        Kp, Np = P[li], P[li + 1]
        last = (li == num_layers - 1)
        o_dtype = prep.out_dtype if last else c_dtype
        o_item = jnp.dtype(o_dtype).itemsize
        tn = _pick_div_tile(Np, tn_pref)
        tk = _pick_div_tile(Kp, tk_pref)
        while _tiled_footprint(tm, tn, tk, c_item, o_item) > budget and tk > 256:
            tk = _pick_div_tile(Kp, max(256, tk // 2))
        while _tiled_footprint(tm, tn, tk, c_item, o_item) > budget and tn > 256:
            tn = _pick_div_tile(Np, max(256, tn // 2))
        vmem_limit = _vmem_limit_bytes(
            _tiled_footprint(tm, tn, tk, c_item, o_item), prep.vmem_cap)
        h = _linear_tiled_call(h, wp, bp, apply_relu=not last,
                               out_dtype=o_dtype, tm=tm, tn=tn, tk=tk,
                               vmem_limit=vmem_limit)
    return h[:M, :prep.dims[-1]]


# ---------------------------------------------------------------------------
# One-time parameter preparation + forward dispatch.
# ---------------------------------------------------------------------------
@dataclasses.dataclass
class PreparedMLP:
    dims: tuple
    dims_p: tuple
    padded_params: tuple          # ((wp, bp), ...) padded + cast, built once
    compute_dtype: object
    out_dtype: object
    use_fused: bool
    vmem_cap: int


def mlp_prepare(params, input_size, *, compute_dtype=jnp.float32,
                out_dtype=jnp.float32, force_tiled=False):
    """Pad + cast parameters ONCE and choose fused vs. tiled path.

    compute_dtype=jnp.bfloat16 halves weight DMA bytes on v6e/v7x (f32 MXU
    accumulation is kept); it is opt-in to preserve exact f32 semantics.
    """
    dims = (int(input_size),) + tuple(int(w.shape[1]) for (w, _) in params)
    num_layers = len(params)
    cap = _vmem_capacity_bytes()
    # Generation-aware fused-path budget (24 MiB on v6e/v7x, 24 MiB on 128-MiB
    # parts too — always paired with an explicit vmem_limit_bytes).
    budget = min(cap * 3 // 8, 24 << 20)

    dims_p_fused = tuple(_round_up(d, _LANE) for d in dims)
    footprint = _fused_footprint_bytes(256, dims_p_fused, num_layers,
                                       compute_dtype, out_dtype)
    use_fused = (not force_tiled) and footprint <= budget

    dims_p = dims_p_fused if use_fused else tuple(_pick_feat_pad(d) for d in dims)
    padded = []
    for li, (w, b) in enumerate(params):
        kp, np_ = dims_p[li], dims_p[li + 1]
        wp = _pad2d(jnp.asarray(w, jnp.float32), kp, np_).astype(compute_dtype)
        bp = _pad2d(jnp.asarray(b, jnp.float32).reshape(1, -1), 1, np_)  # f32
        padded.append((wp, bp))

    return PreparedMLP(dims=dims, dims_p=dims_p, padded_params=tuple(padded),
                       compute_dtype=compute_dtype, out_dtype=out_dtype,
                       use_fused=use_fused, vmem_cap=cap)


def mlp_forward(prep: PreparedMLP, x):
    if prep.use_fused:
        return _mlp_forward_fused(prep, x)
    return _mlp_forward_tiled(prep, x)


# ---------------------------------------------------------------------------
# Parameter init (matches PyTorch nn.Linear shapes/init style) + reference.
# ---------------------------------------------------------------------------
def init_mlp_params(key, input_size, hidden_size, output_size, num_hidden_layers):
    dims = [input_size] + [hidden_size] * num_hidden_layers + [output_size]
    params = []
    for i in range(len(dims) - 1):
        fan_in, fan_out = dims[i], dims[i + 1]
        key, wk, bk = jax.random.split(key, 3)
        bound = 1.0 / jnp.sqrt(jnp.float32(fan_in))
        w = jax.random.uniform(wk, (fan_in, fan_out), jnp.float32, -bound, bound)
        b = jax.random.uniform(bk, (fan_out,), jnp.float32, -bound, bound)
        params.append((w, b))
    return params


def mlp_reference(params, x):
    h = x
    n_layers = len(params)
    for idx, (w, b) in enumerate(params):
        h = h @ w + b
        if idx != n_layers - 1:
            h = jnp.maximum(h, 0.0)
    return h


if __name__ == "__main__":
    # Shapes consistent with MLPModel(input_size, hidden_size, output_size,
    # num_hidden_layers, name).
    batch = 8
    input_size = 32
    hidden_size = 32
    output_size = 16
    num_hidden_layers = 2

    key = jax.random.PRNGKey(0)
    key, xk = jax.random.split(key)
    x = jax.random.normal(xk, (batch, input_size), dtype=jnp.float32)
    params = init_mlp_params(key, input_size, hidden_size, output_size,
                             num_hidden_layers)

    ref = mlp_reference(params, x)

    # Prepare once (pads/casts params, picks path); forward reuses prepared copies.
    prep_f32 = mlp_prepare(params, input_size, compute_dtype=jnp.float32)
    assert prep_f32.use_fused
    out = jax.block_until_ready(mlp_forward(prep_f32, x))
    assert out.shape == (batch, output_size), out.shape
    assert jnp.allclose(out, ref, atol=1e-5, rtol=1e-5), "fused f32 mismatch"

    # Larger ragged batch: multiple parallel grid steps + padding strip.
    key, xk2 = jax.random.split(key)
    x_big = jax.random.normal(xk2, (50, input_size), dtype=jnp.float32)
    ref_big = mlp_reference(params, x_big)
    out_big = jax.block_until_ready(mlp_forward(prep_f32, x_big))
    assert out_big.shape == (50, output_size)
    assert jnp.allclose(out_big, ref_big, atol=1e-5, rtol=1e-5), "fused big mismatch"

    # bf16 weights/activations + f32 MXU accumulation (v6e/v7x throughput path).
    prep_bf16 = mlp_prepare(params, input_size, compute_dtype=jnp.bfloat16)
    out_bf16 = jax.block_until_ready(mlp_forward(prep_bf16, x))
    assert out_bf16.shape == (batch, output_size)
    assert jnp.allclose(out_bf16, ref, atol=5e-2, rtol=5e-2), "fused bf16 mismatch"

    # Shape-general tiled fallback path (what large hidden sizes would take).
    prep_tiled = mlp_prepare(params, input_size, compute_dtype=jnp.float32,
                             force_tiled=True)
    out_tiled = jax.block_until_ready(mlp_forward(prep_tiled, x))
    assert out_tiled.shape == (batch, output_size)
    assert jnp.allclose(out_tiled, ref, atol=1e-5, rtol=1e-5), "tiled mismatch"

    print("KERNEL_OK")
</pallas_src>

<mosaic_0001>
module attributes {stable_mosaic.version = 11 : i64} {
  func.func @_fused_mlp_kernel(%arg0: i32, %arg1: memref<8x128xf32, #tpu.memory_space<vmem>>, %arg2: memref<128x128xf32, #tpu.memory_space<vmem>>, %arg3: memref<1x128xf32, #tpu.memory_space<vmem>>, %arg4: memref<128x128xf32, #tpu.memory_space<vmem>>, %arg5: memref<1x128xf32, #tpu.memory_space<vmem>>, %arg6: memref<128x128xf32, #tpu.memory_space<vmem>>, %arg7: memref<1x128xf32, #tpu.memory_space<vmem>>, %arg8: memref<8x128xf32, #tpu.memory_space<vmem>>, %arg9: memref<8x128xf32, #tpu.memory_space<vmem>>) attributes {dimension_semantics = [#tpu.dimension_semantics<parallel>], iteration_bounds = array<i64: 1>, scalar_prefetch = 0 : i64, scratch_operands = 1 : i64, tpu.core_type = #tpu.core_type<tc>, window_params = [{transform_indices = @transform_0, window_bounds = array<i64: 8, 128>}, {pipeline_mode = #tpu.pipeline_mode<synchronous>, transform_indices = @transform_1, window_bounds = array<i64: 128, 128>}, {pipeline_mode = #tpu.pipeline_mode<synchronous>, transform_indices = @transform_2, window_bounds = array<i64: 1, 128>}, {pipeline_mode = #tpu.pipeline_mode<synchronous>, transform_indices = @transform_3, window_bounds = array<i64: 128, 128>}, {pipeline_mode = #tpu.pipeline_mode<synchronous>, transform_indices = @transform_4, window_bounds = array<i64: 1, 128>}, {pipeline_mode = #tpu.pipeline_mode<synchronous>, transform_indices = @transform_5, window_bounds = array<i64: 128, 128>}, {pipeline_mode = #tpu.pipeline_mode<synchronous>, transform_indices = @transform_6, window_bounds = array<i64: 1, 128>}, {transform_indices = @transform_7, window_bounds = array<i64: 8, 128>}]} {
    %c0 = arith.constant 0 : index
    %c0_0 = arith.constant 0 : index
    %0 = vector.load %arg1[%c0, %c0_0] : memref<8x128xf32, #tpu.memory_space<vmem>>, vector<8x128xf32>
    %c0_1 = arith.constant 0 : index
    %c0_2 = arith.constant 0 : index
    %1 = vector.load %arg2[%c0_1, %c0_2] : memref<128x128xf32, #tpu.memory_space<vmem>>, vector<128x128xf32>
    %cst = arith.constant dense<0.000000e+00> : vector<8x128xf32>
    %2 = tpu.matmul %0, %1, %cst {dimension_numbers = #tpu.dot_dimension_numbers<[1], [0], [0], [1], [0, 0, 1, 1], [], []>} : vector<8x128xf32>, vector<128x128xf32>, vector<8x128xf32> -> vector<8x128xf32>
    %c0_3 = arith.constant 0 : index
    %c0_4 = arith.constant 0 : index
    %3 = vector.load %arg3[%c0_3, %c0_4] : memref<1x128xf32, #tpu.memory_space<vmem>>, vector<1x128xf32>
    %4 = vector.broadcast %3 : vector<1x128xf32> to vector<8x128xf32>
    %5 = arith.addf %2, %4 : vector<8x128xf32>
    %cst_5 = arith.constant 0.000000e+00 : f32
    %6 = vector.broadcast %cst_5 : f32 to vector<8x128xf32>
    %7 = arith.maximumf %5, %6 : vector<8x128xf32>
    %c0_6 = arith.constant 0 : index
    %c0_7 = arith.constant 0 : index
    %8 = vector.load %arg9[%c0_6, %c0_7] : memref<8x128xf32, #tpu.memory_space<vmem>>, vector<8x128xf32>
    tpu.vector_store %arg9[%c0_6, %c0_7], %7 {strides = array<i32>} : memref<8x128xf32, #tpu.memory_space<vmem>>, vector<8x128xf32>,
    %c0_8 = arith.constant 0 : index
    %c0_9 = arith.constant 0 : index
    %9 = vector.load %arg9[%c0_8, %c0_9] : memref<8x128xf32, #tpu.memory_space<vmem>>, vector<8x128xf32>
    %c0_10 = arith.constant 0 : index
    %c0_11 = arith.constant 0 : index
    %10 = vector.load %arg4[%c0_10, %c0_11] : memref<128x128xf32, #tpu.memory_space<vmem>>, vector<128x128xf32>
    %cst_12 = arith.constant dense<0.000000e+00> : vector<8x128xf32>
    %11 = tpu.matmul %9, %10, %cst_12 {dimension_numbers = #tpu.dot_dimension_numbers<[1], [0], [0], [1], [0, 0, 1, 1], [], []>} : vector<8x128xf32>, vector<128x128xf32>, vector<8x128xf32> -> vector<8x128xf32>
    %c0_13 = arith.constant 0 : index
    %c0_14 = arith.constant 0 : index
    %12 = vector.load %arg5[%c0_13, %c0_14] : memref<1x128xf32, #tpu.memory_space<vmem>>, vector<1x128xf32>
    %13 = vector.broadcast %12 : vector<1x128xf32> to vector<8x128xf32>
    %14 = arith.addf %11, %13 : vector<8x128xf32>
    %cst_15 = arith.constant 0.000000e+00 : f32
    %15 = vector.broadcast %cst_15 : f32 to vector<8x128xf32>
    %16 = arith.maximumf %14, %15 : vector<8x128xf32>
    %c0_16 = arith.constant 0 : index
    %c0_17 = arith.constant 0 : index
    %17 = vector.load %arg9[%c0_16, %c0_17] : memref<8x128xf32, #tpu.memory_space<vmem>>, vector<8x128xf32>
    tpu.vector_store %arg9[%c0_16, %c0_17], %16 {strides = array<i32>} : memref<8x128xf32, #tpu.memory_space<vmem>>, vector<8x128xf32>,
    %c0_18 = arith.constant 0 : index
    %c0_19 = arith.constant 0 : index
    %18 = vector.load %arg9[%c0_18, %c0_19] : memref<8x128xf32, #tpu.memory_space<vmem>>, vector<8x128xf32>
    %c0_20 = arith.constant 0 : index
    %c0_21 = arith.constant 0 : index
    %19 = vector.load %arg6[%c0_20, %c0_21] : memref<128x128xf32, #tpu.memory_space<vmem>>, vector<128x128xf32>
    %cst_22 = arith.constant dense<0.000000e+00> : vector<8x128xf32>
    %20 = tpu.matmul %18, %19, %cst_22 {dimension_numbers = #tpu.dot_dimension_numbers<[1], [0], [0], [1], [0, 0, 1, 1], [], []>} : vector<8x128xf32>, vector<128x128xf32>, vector<8x128xf32> -> vector<8x128xf32>
    %c0_23 = arith.constant 0 : index
    %c0_24 = arith.constant 0 : index
    %21 = vector.load %arg7[%c0_23, %c0_24] : memref<1x128xf32, #tpu.memory_space<vmem>>, vector<1x128xf32>
    %22 = vector.broadcast %21 : vector<1x128xf32> to vector<8x128xf32>
    %23 = arith.addf %20, %22 : vector<8x128xf32>
    %c0_25 = arith.constant 0 : index
    %c0_26 = arith.constant 0 : index
    %24 = vector.load %arg8[%c0_25, %c0_26] : memref<8x128xf32, #tpu.memory_space<vmem>>, vector<8x128xf32>
    tpu.vector_store %arg8[%c0_25, %c0_26], %23 {strides = array<i32>} : memref<8x128xf32, #tpu.memory_space<vmem>>, vector<8x128xf32>,
    return
  }
  func.func @transform_0(%arg0: i32) -> (i32, i32) {
    %c0_i32 = arith.constant 0 : i32
    %c0_i32_0 = arith.constant 0 : i32
    return %arg0, %c0_i32 : i32, i32
  }
  func.func @transform_1(%arg0: i32) -> (i32, i32) {
    %c0_i32 = arith.constant 0 : i32
    %c0_i32_0 = arith.constant 0 : i32
    %c0_i32_1 = arith.constant 0 : i32
    return %c0_i32, %c0_i32_0 : i32, i32
  }
  func.func @transform_2(%arg0: i32) -> (i32, i32) {
    %c0_i32 = arith.constant 0 : i32
    %c0_i32_0 = arith.constant 0 : i32
    %c0_i32_1 = arith.constant 0 : i32
    return %c0_i32, %c0_i32_0 : i32, i32
  }
  func.func @transform_3(%arg0: i32) -> (i32, i32) {
    %c0_i32 = arith.constant 0 : i32
    %c0_i32_0 = arith.constant 0 : i32
    %c0_i32_1 = arith.constant 0 : i32
    return %c0_i32, %c0_i32_0 : i32, i32
  }
  func.func @transform_4(%arg0: i32) -> (i32, i32) {
    %c0_i32 = arith.constant 0 : i32
    %c0_i32_0 = arith.constant 0 : i32
    %c0_i32_1 = arith.constant 0 : i32
    return %c0_i32, %c0_i32_0 : i32, i32
  }
  func.func @transform_5(%arg0: i32) -> (i32, i32) {
    %c0_i32 = arith.constant 0 : i32
    %c0_i32_0 = arith.constant 0 : i32
    %c0_i32_1 = arith.constant 0 : i32
    return %c0_i32, %c0_i32_0 : i32, i32
  }
  func.func @transform_6(%arg0: i32) -> (i32, i32) {
    %c0_i32 = arith.constant 0 : i32
    %c0_i32_0 = arith.constant 0 : i32
    %c0_i32_1 = arith.constant 0 : i32
    return %c0_i32, %c0_i32_0 : i32, i32
  }
  func.func @transform_7(%arg0: i32) -> (i32, i32) {
    %c0_i32 = arith.constant 0 : i32
    %c0_i32_0 = arith.constant 0 : i32
    return %arg0, %c0_i32 : i32, i32
  }
}

</mosaic_0001>

<llo_original>
// kernel: tpu_custom_call.1
$region0: #{tpu_custom_call.1}
  #allocation0 [shape = 'u32[]', space=smem, size = 0x4, offset = 0x4, fixed_abs, tag = 'smem constant byte address 0x4 - core index']
  #allocation1 [shape = 'u32[144,128]{1,0:T(1,128)}', space=vmem, size = 0x12000, scoped, tag = 'internal scratch']
  #allocation2 [shape = 'f32[8,128]{1,0:T(8,128)}', space=vmem, size = 0x1000, scoped, tag = 'scratch operand']
  %s0 = inlined_call_operand.hbm [shape: f32[8,128], index: 0, kind: input, shape index: {}]
  %s1 = inlined_call_operand.hbm [shape: f32[128,128], index: 1, kind: input, shape index: {}]
  %s2 = inlined_call_operand.vmem [shape: f32[1,128], index: 2, kind: input, shape index: {}]
  %s3 = inlined_call_operand.hbm [shape: f32[128,128], index: 3, kind: input, shape index: {}]
  %s4 = inlined_call_operand.vmem [shape: f32[1,128], index: 4, kind: input, shape index: {}]
  %s5 = inlined_call_operand.hbm [shape: f32[128,128], index: 5, kind: input, shape index: {}]
  %s6 = inlined_call_operand.vmem [shape: f32[1,128], index: 6, kind: input, shape index: {}]
  %s7 = inlined_call_operand.hbm [shape: f32[8,128], index: 7, kind: output, shape index: {}]
  %s8 = sld [smem:[#allocation0]]
  $region54: #{tpu_custom_call.1} parent=0
    _
  %s10 = ssub.s32 1, %s8
  %s11 = scalar_select 0, %s10, %s8
  $region1: #{tpu_custom_call.1} parent=0
    #allocation3 [shape = 'u8[4096]{0}', space=vmem, size = 0x1000, scoped, tag = 'input window, operand 0, single buffered']
    #allocation4 [shape = 's32[1]{0}', space=sflag, size = 0x4, scoped, tag = 'scoped memory for tpu_custom_call.1']
    #allocation5 [shape = 's32[1]{0}', space=sflag, size = 0x4, scoped, tag = 'scoped memory for tpu_custom_call.1']
    #allocation6 [shape = 'u8[65536]{0}', space=vmem, size = 0x10000, scoped, tag = 'input window, operand 1, single buffered']
    #allocation7 [shape = 's32[1]{0}', space=sflag, size = 0x4, scoped, tag = 'scoped memory for tpu_custom_call.1']
    #allocation8 [shape = 'u8[65536]{0}', space=vmem, size = 0x10000, scoped, tag = 'input window, operand 3, single buffered']
    #allocation9 [shape = 'u8[65536]{0}', space=vmem, size = 0x10000, scoped, tag = 'input window, operand 5, single buffered']
    #allocation10 [shape = 's32[1]{0}', space=sflag, size = 0x4, scoped, tag = 'scoped memory for tpu_custom_call.1']
    #allocation11 [shape = 'u8[4096]{0}', space=vmem, size = 0x1000, scoped, tag = 'output window, operand 0, single buffered']
    %12 = vsyncpa [#allocation4], 0
    %13 = vsyncpa [#allocation7], 0
    %14 = vsyncpa [#allocation10], 0
    %15 = vsyncpa [#allocation5], 0
    // Predicated region
    $region2: #{tpu_custom_call.1} parent=1 // pred_check
      _
    $region3: #{tpu_custom_call.1} parent=1 // pred_check_branch
      %17 = sbr.rel (0) target = $region5
    $region4: #{tpu_custom_call.1} parent=1 // pred_region
      %s19 = ssub.s32 128, 128
      %20 = vsyncadd [#allocation4], %s19
      %s22 = sshll.u32 [#allocation3], 4
      %s23 = int_to_ptr.vmem [resolvable:$true] %s22
      %25 = dma.hbm_to_vmem [thread:$0]  %s0, 128, %s23, [#allocation4]
    $region5: #{tpu_custom_call.1} parent=1 // pred_fallthru
      _
    // Predicated region
    $region6: #{tpu_custom_call.1} parent=1 // pred_check
      _
    $region7: #{tpu_custom_call.1} parent=1 // pred_check_branch
      %27 = sbr.rel (0) target = $region9
    $region8: #{tpu_custom_call.1} parent=1 // pred_region
      %s29 = ssub.s32 2048, 2048
      %30 = vsyncadd [#allocation7], %s29
      %s31 = sshll.u32 [#allocation6], 4
      %s32 = int_to_ptr.vmem [resolvable:$true] %s31
      %37 = dma.hbm_to_vmem [thread:$0]  %s1, 2048, %s32, [#allocation7], 128, 128, 8
    $region9: #{tpu_custom_call.1} parent=1 // pred_fallthru
      _
    // Predicated region
    $region10: #{tpu_custom_call.1} parent=1 // pred_check
      _
    $region11: #{tpu_custom_call.1} parent=1 // pred_check_branch
      %39 = sbr.rel (0) target = $region13
    $region12: #{tpu_custom_call.1} parent=1 // pred_region
      _
    $region13: #{tpu_custom_call.1} parent=1 // pred_fallthru
      _
    // Predicated region
    $region14: #{tpu_custom_call.1} parent=1 // pred_check
      _
    $region15: #{tpu_custom_call.1} parent=1 // pred_check_branch
      %41 = sbr.rel (0) target = $region17
    $region16: #{tpu_custom_call.1} parent=1 // pred_region
      %s43 = ssub.s32 2048, 2048
      %44 = vsyncadd [#allocation7], %s43
      %s45 = sshll.u32 [#allocation8], 4
      %s46 = int_to_ptr.vmem [resolvable:$true] %s45
      %51 = dma.hbm_to_vmem [thread:$0]  %s3, 2048, %s46, [#allocation7], 128, 128, 8
    $region17: #{tpu_custom_call.1} parent=1 // pred_fallthru
      _
    // Predicated region
    $region18: #{tpu_custom_call.1} parent=1 // pred_check
      _
    $region19: #{tpu_custom_call.1} parent=1 // pred_check_branch
      %53 = sbr.rel (0) target = $region21
    $region20: #{tpu_custom_call.1} parent=1 // pred_region
      _
    $region21: #{tpu_custom_call.1} parent=1 // pred_fallthru
      _
    // Predicated region
    $region22: #{tpu_custom_call.1} parent=1 // pred_check
      _
    $region23: #{tpu_custom_call.1} parent=1 // pred_check_branch
      %55 = sbr.rel (0) target = $region25
    $region24: #{tpu_custom_call.1} parent=1 // pred_region
      %s57 = ssub.s32 2048, 2048
      %58 = vsyncadd [#allocation10], %s57
      %s59 = sshll.u32 [#allocation9], 4
      %s60 = int_to_ptr.vmem [resolvable:$true] %s59
      %65 = dma.hbm_to_vmem [thread:$0]  %s5, 2048, %s60, [#allocation10], 128, 128, 8
    $region25: #{tpu_custom_call.1} parent=1 // pred_fallthru
      _
    // Predicated region
    $region26: #{tpu_custom_call.1} parent=1 // pred_check
      _
    $region27: #{tpu_custom_call.1} parent=1 // pred_check_branch
      %67 = sbr.rel (0) target = $region29
    $region28: #{tpu_custom_call.1} parent=1 // pred_region
      _
    $region29: #{tpu_custom_call.1} parent=1 // pred_fallthru
      _
    // Predicated region
    $region30: #{tpu_custom_call.1} parent=1 // pred_check
      _
    $region31: #{tpu_custom_call.1} parent=1 // pred_check_branch
      %69 = sbr.rel (0) target = $region33
    $region32: #{tpu_custom_call.1} parent=1 // pred_region
      %70 = dma.done [#allocation4], 128
    $region33: #{tpu_custom_call.1} parent=1 // pred_fallthru
      _
    // Predicated region
    $region34: #{tpu_custom_call.1} parent=1 // pred_check
      _
    $region35: #{tpu_custom_call.1} parent=1 // pred_check_branch
      %72 = sbr.rel (0) target = $region37
    $region36: #{tpu_custom_call.1} parent=1 // pred_region
      %73 = dma.done [#allocation7], 2048
    $region37: #{tpu_custom_call.1} parent=1 // pred_fallthru
      _
    // Predicated region
    $region38: #{tpu_custom_call.1} parent=1 // pred_check
      _
    $region39: #{tpu_custom_call.1} parent=1 // pred_check_branch
      %75 = sbr.rel (0) target = $region41
    $region40: #{tpu_custom_call.1} parent=1 // pred_region
      %76 = dma.done [#allocation7], 2048
    $region41: #{tpu_custom_call.1} parent=1 // pred_fallthru
      _
    // Predicated region
    $region42: #{tpu_custom_call.1} parent=1 // pred_check
      _
    $region43: #{tpu_custom_call.1} parent=1 // pred_check_branch
      %78 = sbr.rel (0) target = $region45
    $region44: #{tpu_custom_call.1} parent=1 // pred_region
      %79 = dma.done [#allocation10], 2048
    $region45: #{tpu_custom_call.1} parent=1 // pred_fallthru
      _
    %v80 = vld [vmem:[#allocation3] sm:$0xff]
    %v81 = vld [vmem:[#allocation6] sm:$0xff]
    %v82 = vld [vmem:[#allocation6 + $0x8] sm:$0xff]
    %v83 = vld [vmem:[#allocation6 + $0x10] sm:$0xff]
    %v84 = vld [vmem:[#allocation6 + $0x18] sm:$0xff]
    %v85 = vld [vmem:[#allocation6 + $0x20] sm:$0xff]
    %v86 = vld [vmem:[#allocation6 + $0x28] sm:$0xff]
    %v87 = vld [vmem:[#allocation6 + $0x30] sm:$0xff]
    %v88 = vld [vmem:[#allocation6 + $0x38] sm:$0xff]
    %v89 = vld [vmem:[#allocation6 + $0x40] sm:$0xff]
    %v90 = vld [vmem:[#allocation6 + $0x48] sm:$0xff]
    %v91 = vld [vmem:[#allocation6 + $0x50] sm:$0xff]
    %v92 = vld [vmem:[#allocation6 + $0x58] sm:$0xff]
    %v93 = vld [vmem:[#allocation6 + $0x60] sm:$0xff]
    %v94 = vld [vmem:[#allocation6 + $0x68] sm:$0xff]
    %v95 = vld [vmem:[#allocation6 + $0x70] sm:$0xff]
    %v96 = vld [vmem:[#allocation6 + $0x78] sm:$0xff]
    %v97 = vld [vmem:[%s2] sm:$0x1]
    %v99 = vlaneseq
    %v100 = vshrl.u32 %v99, 7
    %v101 = vsub.s32 0, %v100
    %v102 = vrot.slane %v97, %v101
    %104 = vmatprep.subr.mxu0 0.0
    %105 = vmatpush1.msra.mxu0 %v96
    %106 = vmatprep.subr.mxu0 0.0
    %107 = vmatpush1.msra.mxu0 %v95
    %108 = vmatprep.subr.mxu0 0.0
    %109 = vmatpush1.msra.mxu0 %v94
    %110 = vmatprep.subr.mxu0 0.0
    %111 = vmatpush1.msra.mxu0 %v93
    %112 = vmatprep.subr.mxu0 0.0
    %113 = vmatpush1.msra.mxu0 %v92
    %114 = vmatprep.subr.mxu0 0.0
    %115 = vmatpush1.msra.mxu0 %v91
    %116 = vmatprep.subr.mxu0 0.0
    %117 = vmatpush1.msra.mxu0 %v90
    %118 = vmatprep.subr.mxu0 0.0
    %119 = vmatpush1.msra.mxu0 %v89
    %120 = vmatprep.subr.mxu0 0.0
    %121 = vmatpush1.msra.mxu0 %v88
    %122 = vmatprep.subr.mxu0 0.0
    %123 = vmatpush1.msra.mxu0 %v87
    %124 = vmatprep.subr.mxu0 0.0
    %125 = vmatpush1.msra.mxu0 %v86
    %126 = vmatprep.subr.mxu0 0.0
    %127 = vmatpush1.msra.mxu0 %v85
    %128 = vmatprep.subr.mxu0 0.0
    %129 = vmatpush1.msra.mxu0 %v84
    %130 = vmatprep.subr.mxu0 0.0
    %131 = vmatpush1.msra.mxu0 %v83
    %132 = vmatprep.subr.mxu0 0.0
    %133 = vmatpush1.msra.mxu0 %v82
    %134 = vmatprep.subr.mxu0 0.0
    %135 = vmatpush1.msra.mxu0 %v81
    %136 = vmatprep.subr.mxu0 0.0
    %137 = vmatpush2.msra.mxu0 0.0
    %138 = vmatprep.subr.mxu0 0.0
    %139 = vmatpush2.msra.mxu0 0.0
    %140 = vmatprep.subr.mxu0 0.0
    %141 = vmatpush2.msra.mxu0 0.0
    %142 = vmatprep.subr.mxu0 0.0
    %143 = vmatpush2.msra.mxu0 0.0
    %144 = vmatprep.subr.mxu0 0.0
    %145 = vmatpush2.msra.mxu0 0.0
    %146 = vmatprep.subr.mxu0 0.0
    %147 = vmatpush2.msra.mxu0 0.0
    %148 = vmatprep.subr.mxu0 0.0
    %149 = vmatpush2.msra.mxu0 0.0
    %150 = vmatprep.subr.mxu0 0.0
    %151 = vmatpush2.msra.mxu0 0.0
    %152 = vmatprep.subr.mxu0 0.0
    %153 = vmatpush2.msra.mxu0 0.0
    %154 = vmatprep.subr.mxu0 0.0
    %155 = vmatpush2.msra.mxu0 0.0
    %156 = vmatprep.subr.mxu0 0.0
    %157 = vmatpush2.msra.mxu0 0.0
    %158 = vmatprep.subr.mxu0 0.0
    %159 = vmatpush2.msra.mxu0 0.0
    %160 = vmatprep.subr.mxu0 0.0
    %161 = vmatpush2.msra.mxu0 0.0
    %162 = vmatprep.subr.mxu0 0.0
    %163 = vmatpush2.msra.mxu0 0.0
    %164 = vmatprep.subr.mxu0 0.0
    %165 = vmatpush2.msra.mxu0 0.0
    %166 = vmatprep.subr.mxu0 0.0
    %167 = vmatpush2.msra.mxu0 0.0
    %168 = vmatprep.mubr.f32.mxu0 0.0
    %169 = vmatmul.mubr.f32.gmra.mxu0 %v80
    %v170 = vpop.f32.mrf.mxu0
    %v171 = vadd.f32 %v102, %v170
    %v172 = vpop.f32.mrf.mxu0
    %173 = vdwg.mxu0
    %v174 = vmax.f32 %v171, 0.0
    %175 = vst [vmem:[#allocation2] sm:$0xff] %v174
    %v176 = vld [vmem:[#allocation2] sm:$0xff]
    %v177 = vld [vmem:[#allocation8] sm:$0xff]
    %v178 = vld [vmem:[#allocation8 + $0x8] sm:$0xff]
    %v179 = vld [vmem:[#allocation8 + $0x10] sm:$0xff]
    %v180 = vld [vmem:[#allocation8 + $0x18] sm:$0xff]
    %v181 = vld [vmem:[#allocation8 + $0x20] sm:$0xff]
    %v182 = vld [vmem:[#allocation8 + $0x28] sm:$0xff]
    %v183 = vld [vmem:[#allocation8 + $0x30] sm:$0xff]
    %v184 = vld [vmem:[#allocation8 + $0x38] sm:$0xff]
    %v185 = vld [vmem:[#allocation8 + $0x40] sm:$0xff]
    %v186 = vld [vmem:[#allocation8 + $0x48] sm:$0xff]
    %v187 = vld [vmem:[#allocation8 + $0x50] sm:$0xff]
    %v188 = vld [vmem:[#allocation8 + $0x58] sm:$0xff]
    %v189 = vld [vmem:[#allocation8 + $0x60] sm:$0xff]
    %v190 = vld [vmem:[#allocation8 + $0x68] sm:$0xff]
    %v191 = vld [vmem:[#allocation8 + $0x70] sm:$0xff]
    %v192 = vld [vmem:[#allocation8 + $0x78] sm:$0xff]
    %v193 = vld [vmem:[%s4] sm:$0x1]
    %v195 = vlaneseq
    %v196 = vshrl.u32 %v195, 7
    %v197 = vsub.s32 0, %v196
    %v198 = vrot.slane %v193, %v197
    %200 = vmatprep.subr.mxu0 0.0
    %201 = vmatpush1.msra.mxu0 %v192
    %202 = vmatprep.subr.mxu0 0.0
    %203 = vmatpush1.msra.mxu0 %v191
    %204 = vmatprep.subr.mxu0 0.0
    %205 = vmatpush1.msra.mxu0 %v190
    %206 = vmatprep.subr.mxu0 0.0
    %207 = vmatpush1.msra.mxu0 %v189
    %208 = vmatprep.subr.mxu0 0.0
    %209 = vmatpush1.msra.mxu0 %v188
    %210 = vmatprep.subr.mxu0 0.0
    %211 = vmatpush1.msra.mxu0 %v187
    %212 = vmatprep.subr.mxu0 0.0
    %213 = vmatpush1.msra.mxu0 %v186
    %214 = vmatprep.subr.mxu0 0.0
    %215 = vmatpush1.msra.mxu0 %v185
    %216 = vmatprep.subr.mxu0 0.0
    %217 = vmatpush1.msra.mxu0 %v184
    %218 = vmatprep.subr.mxu0 0.0
    %219 = vmatpush1.msra.mxu0 %v183
    %220 = vmatprep.subr.mxu0 0.0
    %221 = vmatpush1.msra.mxu0 %v182
    %222 = vmatprep.subr.mxu0 0.0
    %223 = vmatpush1.msra.mxu0 %v181
    %224 = vmatprep.subr.mxu0 0.0
    %225 = vmatpush1.msra.mxu0 %v180
    %226 = vmatprep.subr.mxu0 0.0
    %227 = vmatpush1.msra.mxu0 %v179
    %228 = vmatprep.subr.mxu0 0.0
    %229 = vmatpush1.msra.mxu0 %v178
    %230 = vmatprep.subr.mxu0 0.0
    %231 = vmatpush1.msra.mxu0 %v177
    %232 = vmatprep.subr.mxu0 0.0
    %233 = vmatpush2.msra.mxu0 0.0
    %234 = vmatprep.subr.mxu0 0.0
    %235 = vmatpush2.msra.mxu0 0.0
    %236 = vmatprep.subr.mxu0 0.0
    %237 = vmatpush2.msra.mxu0 0.0
    %238 = vmatprep.subr.mxu0 0.0
    %239 = vmatpush2.msra.mxu0 0.0
    %240 = vmatprep.subr.mxu0 0.0
    %241 = vmatpush2.msra.mxu0 0.0
    %242 = vmatprep.subr.mxu0 0.0
    %243 = vmatpush2.msra.mxu0 0.0
    %244 = vmatprep.subr.mxu0 0.0
    %245 = vmatpush2.msra.mxu0 0.0
    %246 = vmatprep.subr.mxu0 0.0
    %247 = vmatpush2.msra.mxu0 0.0
    %248 = vmatprep.subr.mxu0 0.0
    %249 = vmatpush2.msra.mxu0 0.0
    %250 = vmatprep.subr.mxu0 0.0
    %251 = vmatpush2.msra.mxu0 0.0
    %252 = vmatprep.subr.mxu0 0.0
    %253 = vmatpush2.msra.mxu0 0.0
    %254 = vmatprep.subr.mxu0 0.0
    %255 = vmatpush2.msra.mxu0 0.0
    %256 = vmatprep.subr.mxu0 0.0
    %257 = vmatpush2.msra.mxu0 0.0
    %258 = vmatprep.subr.mxu0 0.0
    %259 = vmatpush2.msra.mxu0 0.0
    %260 = vmatprep.subr.mxu0 0.0
    %261 = vmatpush2.msra.mxu0 0.0
    %262 = vmatprep.subr.mxu0 0.0
    %263 = vmatpush2.msra.mxu0 0.0
    %264 = vmatprep.mubr.f32.mxu0 0.0
    %265 = vmatmul.mubr.f32.gmra.mxu0 %v176
    %v266 = vpop.f32.mrf.mxu0
    %v267 = vadd.f32 %v198, %v266
    %v268 = vpop.f32.mrf.mxu0
    %269 = vdwg.mxu0
    %v270 = vmax.f32 %v267, 0.0
    %271 = vst [vmem:[#allocation2] sm:$0xff] %v270
    %v272 = vld [vmem:[#allocation2] sm:$0xff]
    %v273 = vld [vmem:[#allocation9] sm:$0xff]
    %v274 = vld [vmem:[#allocation9 + $0x8] sm:$0xff]
    %v275 = vld [vmem:[#allocation9 + $0x10] sm:$0xff]
    %v276 = vld [vmem:[#allocation9 + $0x18] sm:$0xff]
    %v277 = vld [vmem:[#allocation9 + $0x20] sm:$0xff]
    %v278 = vld [vmem:[#allocation9 + $0x28] sm:$0xff]
    %v279 = vld [vmem:[#allocation9 + $0x30] sm:$0xff]
    %v280 = vld [vmem:[#allocation9 + $0x38] sm:$0xff]
    %v281 = vld [vmem:[#allocation9 + $0x40] sm:$0xff]
    %v282 = vld [vmem:[#allocation9 + $0x48] sm:$0xff]
    %v283 = vld [vmem:[#allocation9 + $0x50] sm:$0xff]
    %v284 = vld [vmem:[#allocation9 + $0x58] sm:$0xff]
    %v285 = vld [vmem:[#allocation9 + $0x60] sm:$0xff]
    %v286 = vld [vmem:[#allocation9 + $0x68] sm:$0xff]
    %v287 = vld [vmem:[#allocation9 + $0x70] sm:$0xff]
    %v288 = vld [vmem:[#allocation9 + $0x78] sm:$0xff]
    %v289 = vld [vmem:[%s6] sm:$0x1]
    %v291 = vlaneseq
    %v292 = vshrl.u32 %v291, 7
    %v293 = vsub.s32 0, %v292
    %v294 = vrot.slane %v289, %v293
    %296 = vmatprep.subr.mxu0 0.0
    %297 = vmatpush1.msra.mxu0 %v288
    %298 = vmatprep.subr.mxu0 0.0
    %299 = vmatpush1.msra.mxu0 %v287
    %300 = vmatprep.subr.mxu0 0.0
    %301 = vmatpush1.msra.mxu0 %v286
    %302 = vmatprep.subr.mxu0 0.0
    %303 = vmatpush1.msra.mxu0 %v285
    %304 = vmatprep.subr.mxu0 0.0
    %305 = vmatpush1.msra.mxu0 %v284
    %306 = vmatprep.subr.mxu0 0.0
    %307 = vmatpush1.msra.mxu0 %v283
    %308 = vmatprep.subr.mxu0 0.0
    %309 = vmatpush1.msra.mxu0 %v282
    %310 = vmatprep.subr.mxu0 0.0
    %311 = vmatpush1.msra.mxu0 %v281
    %312 = vmatprep.subr.mxu0 0.0
    %313 = vmatpush1.msra.mxu0 %v280
    %314 = vmatprep.subr.mxu0 0.0
    %315 = vmatpush1.msra.mxu0 %v279
    %316 = vmatprep.subr.mxu0 0.0
    %317 = vmatpush1.msra.mxu0 %v278
    %318 = vmatprep.subr.mxu0 0.0
    %319 = vmatpush1.msra.mxu0 %v277
    %320 = vmatprep.subr.mxu0 0.0
    %321 = vmatpush1.msra.mxu0 %v276
    %322 = vmatprep.subr.mxu0 0.0
    %323 = vmatpush1.msra.mxu0 %v275
    %324 = vmatprep.subr.mxu0 0.0
    %325 = vmatpush1.msra.mxu0 %v274
    %326 = vmatprep.subr.mxu0 0.0
    %327 = vmatpush1.msra.mxu0 %v273
    %328 = vmatprep.subr.mxu0 0.0
    %329 = vmatpush2.msra.mxu0 0.0
    %330 = vmatprep.subr.mxu0 0.0
    %331 = vmatpush2.msra.mxu0 0.0
    %332 = vmatprep.subr.mxu0 0.0
    %333 = vmatpush2.msra.mxu0 0.0
    %334 = vmatprep.subr.mxu0 0.0
    %335 = vmatpush2.msra.mxu0 0.0
    %336 = vmatprep.subr.mxu0 0.0
    %337 = vmatpush2.msra.mxu0 0.0
    %338 = vmatprep.subr.mxu0 0.0
    %339 = vmatpush2.msra.mxu0 0.0
    %340 = vmatprep.subr.mxu0 0.0
    %341 = vmatpush2.msra.mxu0 0.0
    %342 = vmatprep.subr.mxu0 0.0
    %343 = vmatpush2.msra.mxu0 0.0
    %344 = vmatprep.subr.mxu0 0.0
    %345 = vmatpush2.msra.mxu0 0.0
    %346 = vmatprep.subr.mxu0 0.0
    %347 = vmatpush2.msra.mxu0 0.0
    %348 = vmatprep.subr.mxu0 0.0
    %349 = vmatpush2.msra.mxu0 0.0
    %350 = vmatprep.subr.mxu0 0.0
    %351 = vmatpush2.msra.mxu0 0.0
    %352 = vmatprep.subr.mxu0 0.0
    %353 = vmatpush2.msra.mxu0 0.0
    %354 = vmatprep.subr.mxu0 0.0
    %355 = vmatpush2.msra.mxu0 0.0
    %356 = vmatprep.subr.mxu0 0.0
    %357 = vmatpush2.msra.mxu0 0.0
    %358 = vmatprep.subr.mxu0 0.0
    %359 = vmatpush2.msra.mxu0 0.0
    %360 = vmatprep.mubr.f32.mxu0 0.0
    %361 = vmatmul.mubr.f32.gmra.mxu0 %v272
    %v362 = vpop.f32.mrf.mxu0
    %v363 = vadd.f32 %v294, %v362
    %v364 = vpop.f32.mrf.mxu0
    %365 = vdwg.mxu0
    %366 = vst [vmem:[#allocation11] sm:$0xff] %v363
    // Predicated region
    $region46: #{tpu_custom_call.1} parent=1 // pred_check
      _
    $region47: #{tpu_custom_call.1} parent=1 // pred_check_branch
      %368 = sbr.rel (0) target = $region49
    $region48: #{tpu_custom_call.1} parent=1 // pred_region
      %s370 = ssub.s32 128, 128
      %371 = vsyncadd [#allocation5], %s370
      %s373 = sshll.u32 [#allocation11], 4
      %s374 = int_to_ptr.vmem [resolvable:$true] %s373
      %376 = dma.vmem_to_hbm [thread:$0]  %s374, 128, %s7, [#allocation5]
    $region49: #{tpu_custom_call.1} parent=1 // pred_fallthru
      _
    // Predicated region
    $region50: #{tpu_custom_call.1} parent=1 // pred_check
      _
    $region51: #{tpu_custom_call.1} parent=1 // pred_check_branch
      %378 = sbr.rel (0) target = $region53
    $region52: #{tpu_custom_call.1} parent=1 // pred_region
      %379 = dma.done [#allocation5], 128
    $region53: #{tpu_custom_call.1} parent=1 // pred_fallthru
      _
    %380 = vsyncpa [#allocation4], 1
    %381 = vsyncpa [#allocation7], 1
    %382 = vsyncpa [#allocation10], 1
    %383 = vsyncpa [#allocation5], 1

</llo_original>
